<compile_context>
chip_gen: v5e
topology: v5e:2x2
jax: 0.10.0
libtpu: 0.0.40
codegen_flags: <defaults>
</compile_context>

<pallas_src>
import functools

import jax
import jax.numpy as jnp
from jax.experimental import pallas as pl
from jax.experimental.pallas import tpu as pltpu


def noisy_topk_router_kernel(x_ref, w_ref, b_ref, noise_ref, router_ref, idx_ref,
                             *, num_experts, top_k):
    # One fused MXU matmul for both router linears: (tm, D) @ (D, 2E) -> f32.
    fused = jnp.dot(x_ref[...], w_ref[...], preferred_element_type=jnp.float32)
    fused = fused + b_ref[...].astype(jnp.float32)
    logits = fused[:, :num_experts]
    noise_logits = fused[:, num_experts:]

    # noise = randn * softplus(noise_logits); the standard-normal samples are
    # an input (stand-in for torch.randn_like), scaling happens here.
    softplus = jnp.logaddexp(noise_logits, 0.0)          # stable log(1 + exp(x))
    noisy = logits + noise_ref[...].astype(jnp.float32) * softplus

    tm = noisy.shape[0]
    neg_inf = jnp.float32(-jnp.inf)
    iota = jax.lax.broadcasted_iota(jnp.int32, (tm, num_experts), 1)

    # Iterative top-k (k is small and static): take the row max, record its
    # lowest-index position (matches torch.topk tie-breaking), knock it out.
    working = noisy
    idx_cols = []
    mx = None
    for t in range(top_k):
        m = jnp.max(working, axis=-1, keepdims=True)
        if t == 0:
            mx = m  # max over the selected set == overall row max; reused below
        is_max = working == m
        idx = jnp.min(jnp.where(is_max, iota, num_experts), axis=-1, keepdims=True)
        sel = iota == idx
        working = jnp.where(sel, neg_inf, working)
        idx_cols.append(idx)

    # Selected positions are exactly where the knockout wrote -inf; no separate
    # sel_mask accumulation needed.  Masked softmax over the selected experts.
    sel_mask = working == neg_inf
    e = jnp.where(sel_mask, jnp.exp(noisy - mx), 0.0)
    denom = jnp.sum(e, axis=-1, keepdims=True)
    inv = pl.reciprocal(denom, approx=True)              # EUP slot, ~free

    router_ref[...] = (e * inv).astype(router_ref.dtype)
    idx_ref[...] = jnp.concatenate(idx_cols, axis=-1).astype(idx_ref.dtype)


def _round_up(v, m):
    return -(-v // m) * m


def _vmem_budgets():
    """Generation-aware (tile budget, scoped-VMEM limit) in bytes.

    Conservative defaults are safe on v7x (64 MiB physical VMEM per TC); on
    128 MiB parts (v5e / v6e) the budget is raised so large-D configs keep
    ~1024-row tiles.  Falls back to the conservative pair if hardware info is
    unavailable."""
    budget, limit = 24 << 20, 48 << 20
    try:
        cap = int(getattr(pltpu.get_tpu_info(), "vmem_capacity_bytes", 0))
        if cap >= (96 << 20):
            budget, limit = 56 << 20, 80 << 20
    except Exception:
        pass
    return budget, limit


def _pick_tm(n_tokens, d, e, top_k, in_itemsize, vmem_budget_bytes, *, max_tm=1024):
    """Largest multiple-of-8 token tile whose double-buffered working set fits
    the VMEM budget, additionally capped so the grid has >= 2 steps whenever
    possible (keeps both of v7x's TensorCores busy; no-op on 1-TC parts)."""
    # Fused weight + bias blocks (constant block index -> fetched once; count
    # the pair of pipeline buffers anyway).
    weight_bytes = 2 * (d * 2 * e + 2 * e) * in_itemsize
    # Streamed bytes per token row, x2 for double buffering:
    #   inputs x (D) + noise (E) in the input dtype, outputs router (E, f32)
    #   and idx (top_k, i32).
    per_row = 2 * ((d + e) * in_itemsize + e * 4 + top_k * 4)
    avail = max(vmem_budget_bytes - weight_bytes, 1 << 20)
    tm = int(min(max_tm, max(8, avail // per_row)))
    tm = max(8, (tm // 8) * 8)
    # >= 2 grid steps when possible (megacore), and don't exceed the problem.
    tm = min(tm, max(8, _round_up(pl.cdiv(n_tokens, 2), 8)))
    return tm


def fuse_router_params(w1, b1, w2, b2):
    """One-time parameter prep (hoisted out of the per-call path): fuse the two
    nn.Linear layers (weights in PyTorch (E, D) layout) into a single (D, 2E)
    matmul operand and a (1, 2E) bias."""
    w_cat = jnp.concatenate([w1.T, w2.T], axis=1)
    b_cat = jnp.concatenate([b1, b2]).reshape(1, -1)
    return w_cat, b_cat


def noisy_topk_router(x, w_cat, b_cat, noise, top_k, *, tm=None):
    """NoisyTopkRouter forward.

    x:      (N, D)    flattened mh_output
    w_cat:  (D, 2E)   fused router weights (from fuse_router_params)
    b_cat:  (1, 2E)   fused router biases
    noise:  (N, E)    standard-normal samples (stand-in for torch.randn_like)
    Returns (router_output (N, E) float32, indices (N, top_k) int32).
    """
    N, D = x.shape
    E = w_cat.shape[1] // 2

    budget, vmem_limit = _vmem_budgets()
    if tm is None:
        tm = _pick_tm(N, D, E, top_k, jnp.dtype(x.dtype).itemsize, budget)

    # Ragged final block is handled by Pallas (no jnp.pad HBM copy of x/noise);
    # OOB rows of the last tile are garbage on read and discarded on write.
    grid = (pl.cdiv(N, tm),)

    kernel = functools.partial(noisy_topk_router_kernel,
                               num_experts=E, top_k=top_k)
    router, idx = pl.pallas_call(
        kernel,
        out_shape=(
            jax.ShapeDtypeStruct((N, E), jnp.float32),
            jax.ShapeDtypeStruct((N, top_k), jnp.int32),
        ),
        grid_spec=pltpu.PrefetchScalarGridSpec(
            num_scalar_prefetch=0,
            grid=grid,
            in_specs=[
                pl.BlockSpec((tm, D), lambda i: (i, 0)),      # x tile (dominant stream)
                pl.BlockSpec((D, 2 * E), lambda i: (0, 0)),   # fused W^T (resident)
                pl.BlockSpec((1, 2 * E), lambda i: (0, 0)),   # fused bias (resident)
                pl.BlockSpec((tm, E), lambda i: (i, 0)),      # noise tile (streamed)
            ],
            out_specs=[
                pl.BlockSpec((tm, E), lambda i: (i, 0)),
                pl.BlockSpec((tm, top_k), lambda i: (i, 0)),
            ],
        ),
        compiler_params=pltpu.CompilerParams(
            dimension_semantics=("parallel",),
            vmem_limit_bytes=vmem_limit,
        ),
    )(x, w_cat, b_cat, noise)
    return router, idx


def _reference(x, w1, b1, w2, b2, noise, top_k):
    logits = x @ w1.T + b1
    noise_logits = x @ w2.T + b2
    noisy = logits + noise * jnp.logaddexp(noise_logits, 0.0)
    vals, idx = jax.lax.top_k(noisy, top_k)
    rows = jnp.arange(noisy.shape[0])[:, None]
    sparse = jnp.full_like(noisy, -jnp.inf).at[rows, idx].set(vals)
    return jax.nn.softmax(sparse, axis=-1), idx


if __name__ == "__main__":
    batch, seq, n_embed, num_experts, top_k = 2, 8, 32, 8, 2
    key = jax.random.PRNGKey(0)
    k1, k2, k3, k4, k5, k6 = jax.random.split(key, 6)

    # Deterministic synthetic parameters (PyTorch Linear stores weight as (E, D)).
    x = jax.random.normal(k1, (batch, seq, n_embed), jnp.float32)
    w1 = jax.random.normal(k2, (num_experts, n_embed), jnp.float32) * 0.1
    b1 = jax.random.normal(k3, (num_experts,), jnp.float32) * 0.1
    w2 = jax.random.normal(k4, (num_experts, n_embed), jnp.float32) * 0.1
    b2 = jax.random.normal(k5, (num_experts,), jnp.float32) * 0.1
    # Standard-normal samples standing in for torch.randn_like(logits).
    # TODO(synk): torch.randn_like sampling is done host-side; an in-kernel
    # pltpu.prng_random_bits variant would change the RNG stream semantics.
    noise = jax.random.normal(k6, (batch, seq, num_experts), jnp.float32)

    x2 = x.reshape(-1, n_embed)
    noise2 = noise.reshape(-1, num_experts)

    # One-time parameter fusion, hoisted out of the forward path.
    w_cat, b_cat = fuse_router_params(w1, b1, w2, b2)

    router, idx = noisy_topk_router(x2, w_cat, b_cat, noise2, top_k)
    router = router.reshape(batch, seq, num_experts)
    idx = idx.reshape(batch, seq, top_k)
    jax.block_until_ready((router, idx))

    # Sanity check against a pure-JAX reference (approx reciprocal -> ~1e-3 tol).
    ref_router, ref_idx = _reference(x2, w1, b1, w2, b2, noise2, top_k)
    assert jnp.allclose(router.reshape(-1, num_experts), ref_router, atol=2e-3)
    assert jnp.array_equal(idx.reshape(-1, top_k), ref_idx)

    # Ragged-N path (N not a multiple of 8 / tm): exercises the no-pad grid.
    n_rag = 13
    router_r, idx_r = noisy_topk_router(x2[:n_rag], w_cat, b_cat,
                                        noise2[:n_rag], top_k)
    jax.block_until_ready((router_r, idx_r))
    assert jnp.allclose(router_r, ref_router[:n_rag], atol=2e-3)
    assert jnp.array_equal(idx_r, ref_idx[:n_rag])

    print("KERNEL_OK")
</pallas_src>

<mosaic_0001>
module attributes {stable_mosaic.version = 11 : i64} {
  func.func @noisy_topk_router_kernel(%arg0: i32, %arg1: memref<8x32xf32, #tpu.memory_space<vmem>>, %arg2: memref<32x16xf32, #tpu.memory_space<vmem>>, %arg3: memref<1x16xf32, #tpu.memory_space<vmem>>, %arg4: memref<8x8xf32, #tpu.memory_space<vmem>>, %arg5: memref<8x8xf32, #tpu.memory_space<vmem>>, %arg6: memref<8x2xi32, #tpu.memory_space<vmem>>) attributes {dimension_semantics = [#tpu.dimension_semantics<parallel>], iteration_bounds = array<i64: 2>, scalar_prefetch = 0 : i64, scratch_operands = 0 : i64, tpu.core_type = #tpu.core_type<tc>, window_params = [{transform_indices = @transform_0, window_bounds = array<i64: 8, 32>}, {pipeline_mode = #tpu.pipeline_mode<synchronous>, transform_indices = @transform_1, window_bounds = array<i64: 32, 16>}, {pipeline_mode = #tpu.pipeline_mode<synchronous>, transform_indices = @transform_2, window_bounds = array<i64: 1, 16>}, {transform_indices = @transform_3, window_bounds = array<i64: 8, 8>}, {transform_indices = @transform_4, window_bounds = array<i64: 8, 8>}, {transform_indices = @transform_5, window_bounds = array<i64: 8, 2>}]} {
    %c0 = arith.constant 0 : index
    %c0_0 = arith.constant 0 : index
    %0 = vector.load %arg1[%c0, %c0_0] : memref<8x32xf32, #tpu.memory_space<vmem>>, vector<8x32xf32>
    %c0_1 = arith.constant 0 : index
    %c0_2 = arith.constant 0 : index
    %1 = vector.load %arg2[%c0_1, %c0_2] : memref<32x16xf32, #tpu.memory_space<vmem>>, vector<32x16xf32>
    %cst = arith.constant dense<0.000000e+00> : vector<8x16xf32>
    %2 = tpu.matmul %0, %1, %cst {dimension_numbers = #tpu.dot_dimension_numbers<[1], [0], [0], [1], [0, 0, 1, 1], [], []>} : vector<8x32xf32>, vector<32x16xf32>, vector<8x16xf32> -> vector<8x16xf32>
    %c0_3 = arith.constant 0 : index
    %c0_4 = arith.constant 0 : index
    %3 = vector.load %arg3[%c0_3, %c0_4] : memref<1x16xf32, #tpu.memory_space<vmem>>, vector<1x16xf32>
    %4 = vector.broadcast %3 : vector<1x16xf32> to vector<8x16xf32>
    %5 = arith.addf %2, %4 : vector<8x16xf32>
    %6 = vector.extract_strided_slice %5 {offsets = [0, 0], sizes = [8, 8], strides = [1, 1]} : vector<8x16xf32> to vector<8x8xf32>
    %7 = vector.extract_strided_slice %5 {offsets = [0, 8], sizes = [8, 8], strides = [1, 1]} : vector<8x16xf32> to vector<8x8xf32>
    %cst_5 = arith.constant 0.000000e+00 : f32
    %8 = vector.broadcast %cst_5 : f32 to vector<8x8xf32>
    %9 = arith.maximumf %7, %8 : vector<8x8xf32>
    %10 = vector.broadcast %cst_5 : f32 to vector<8x8xf32>
    %11 = arith.subf %7, %10 : vector<8x8xf32>
    %12 = arith.cmpf one, %11, %11 : vector<8x8xf32>
    %13 = vector.broadcast %cst_5 : f32 to vector<8x8xf32>
    %14 = arith.addf %7, %13 : vector<8x8xf32>
    %15 = math.absf %11 : vector<8x8xf32>
    %cst_6 = arith.constant 0.000000e+00 : f32
    %16 = vector.broadcast %cst_6 : f32 to vector<8x8xf32>
    %17 = arith.subf %16, %15 : vector<8x8xf32>
    %18 = math.exp %17 : vector<8x8xf32>
    %19 = math.log1p %18 : vector<8x8xf32>
    %20 = arith.addf %9, %19 : vector<8x8xf32>
    %21 = arith.select %12, %14, %20 : vector<8x8xi1>, vector<8x8xf32>
    %c0_7 = arith.constant 0 : index
    %c0_8 = arith.constant 0 : index
    %22 = vector.load %arg4[%c0_7, %c0_8] : memref<8x8xf32, #tpu.memory_space<vmem>>, vector<8x8xf32>
    %23 = arith.mulf %22, %21 : vector<8x8xf32>
    %24 = arith.addf %6, %23 : vector<8x8xf32>
    %25 = tpu.iota {dimensions = array<i32: 1>} : vector<8x8xi32>
    %cst_9 = arith.constant dense<0xFF800000> : vector<8xf32>
    %26 = vector.multi_reduction <maximumf>, %24, %cst_9 [1] : vector<8x8xf32> to vector<8xf32>
    %27 = vector.shape_cast %26 : vector<8xf32> to vector<8x1xf32>
    %28 = vector.broadcast %27 : vector<8x1xf32> to vector<8x8xf32>
    %29 = arith.cmpf oeq, %24, %28 : vector<8x8xf32>
    %c8_i32 = arith.constant 8 : i32
    %30 = vector.broadcast %c8_i32 : i32 to vector<8x8xi32>
    %31 = arith.select %29, %25, %30 : vector<8x8xi1>, vector<8x8xi32>
    %cst_10 = arith.constant dense<2147483647> : vector<8xi32>
    %32 = vector.multi_reduction <minsi>, %31, %cst_10 [1] : vector<8x8xi32> to vector<8xi32>
    %33 = vector.shape_cast %32 : vector<8xi32> to vector<8x1xi32>
    %34 = vector.broadcast %33 : vector<8x1xi32> to vector<8x8xi32>
    %35 = arith.cmpi eq, %25, %34 : vector<8x8xi32>
    %cst_11 = arith.constant 0xFF800000 : f32
    %36 = vector.broadcast %cst_11 : f32 to vector<8x8xf32>
    %37 = arith.select %35, %36, %24 : vector<8x8xi1>, vector<8x8xf32>
    %cst_12 = arith.constant dense<0xFF800000> : vector<8xf32>
    %38 = vector.multi_reduction <maximumf>, %37, %cst_12 [1] : vector<8x8xf32> to vector<8xf32>
    %39 = vector.shape_cast %38 : vector<8xf32> to vector<8x1xf32>
    %40 = vector.broadcast %39 : vector<8x1xf32> to vector<8x8xf32>
    %41 = arith.cmpf oeq, %37, %40 : vector<8x8xf32>
    %c8_i32_13 = arith.constant 8 : i32
    %42 = vector.broadcast %c8_i32_13 : i32 to vector<8x8xi32>
    %43 = arith.select %41, %25, %42 : vector<8x8xi1>, vector<8x8xi32>
    %cst_14 = arith.constant dense<2147483647> : vector<8xi32>
    %44 = vector.multi_reduction <minsi>, %43, %cst_14 [1] : vector<8x8xi32> to vector<8xi32>
    %45 = vector.shape_cast %44 : vector<8xi32> to vector<8x1xi32>
    %46 = vector.broadcast %45 : vector<8x1xi32> to vector<8x8xi32>
    %47 = arith.cmpi eq, %25, %46 : vector<8x8xi32>
    %cst_15 = arith.constant 0xFF800000 : f32
    %48 = vector.broadcast %cst_15 : f32 to vector<8x8xf32>
    %49 = arith.select %47, %48, %37 : vector<8x8xi1>, vector<8x8xf32>
    %cst_16 = arith.constant 0xFF800000 : f32
    %50 = vector.broadcast %cst_16 : f32 to vector<8x8xf32>
    %51 = arith.cmpf oeq, %49, %50 : vector<8x8xf32>
    %52 = vector.broadcast %27 : vector<8x1xf32> to vector<8x8xf32>
    %53 = arith.subf %24, %52 : vector<8x8xf32>
    %54 = math.exp %53 : vector<8x8xf32>
    %cst_17 = arith.constant 0.000000e+00 : f32
    %55 = vector.broadcast %cst_17 : f32 to vector<8x8xf32>
    %56 = arith.select %51, %54, %55 : vector<8x8xi1>, vector<8x8xf32>
    %cst_18 = arith.constant dense<0.000000e+00> : vector<8xf32>
    %57 = vector.multi_reduction <add>, %56, %cst_18 [1] : vector<8x8xf32> to vector<8xf32>
    %58 = vector.shape_cast %57 : vector<8xf32> to vector<8x1xf32>
    %59 = tpu.reciprocal %58 {approx = true} : vector<8x1xf32> -> vector<8x1xf32>
    %60 = vector.broadcast %59 : vector<8x1xf32> to vector<8x8xf32>
    %61 = arith.mulf %56, %60 : vector<8x8xf32>
    %c0_19 = arith.constant 0 : index
    %c0_20 = arith.constant 0 : index
    %62 = vector.load %arg5[%c0_19, %c0_20] : memref<8x8xf32, #tpu.memory_space<vmem>>, vector<8x8xf32>
    tpu.vector_store %arg5[%c0_19, %c0_20], %61 {strides = array<i32>} : memref<8x8xf32, #tpu.memory_space<vmem>>, vector<8x8xf32>,
    %63 = tpu.concatenate %33, %45 in 1 : vector<8x1xi32>, vector<8x1xi32> -> vector<8x2xi32>
    %c0_21 = arith.constant 0 : index
    %c0_22 = arith.constant 0 : index
    %64 = vector.load %arg6[%c0_21, %c0_22] : memref<8x2xi32, #tpu.memory_space<vmem>>, vector<8x2xi32>
    tpu.vector_store %arg6[%c0_21, %c0_22], %63 {strides = array<i32>} : memref<8x2xi32, #tpu.memory_space<vmem>>, vector<8x2xi32>,
    return
  }
  func.func @transform_0(%arg0: i32) -> (i32, i32) {
    %c0_i32 = arith.constant 0 : i32
    %c0_i32_0 = arith.constant 0 : i32
    return %arg0, %c0_i32 : i32, i32
  }
  func.func @transform_1(%arg0: i32) -> (i32, i32) {
    %c0_i32 = arith.constant 0 : i32
    %c0_i32_0 = arith.constant 0 : i32
    %c0_i32_1 = arith.constant 0 : i32
    return %c0_i32, %c0_i32_0 : i32, i32
  }
  func.func @transform_2(%arg0: i32) -> (i32, i32) {
    %c0_i32 = arith.constant 0 : i32
    %c0_i32_0 = arith.constant 0 : i32
    %c0_i32_1 = arith.constant 0 : i32
    return %c0_i32, %c0_i32_0 : i32, i32
  }
  func.func @transform_3(%arg0: i32) -> (i32, i32) {
    %c0_i32 = arith.constant 0 : i32
    %c0_i32_0 = arith.constant 0 : i32
    return %arg0, %c0_i32 : i32, i32
  }
  func.func @transform_4(%arg0: i32) -> (i32, i32) {
    %c0_i32 = arith.constant 0 : i32
    %c0_i32_0 = arith.constant 0 : i32
    return %arg0, %c0_i32 : i32, i32
  }
  func.func @transform_5(%arg0: i32) -> (i32, i32) {
    %c0_i32 = arith.constant 0 : i32
    %c0_i32_0 = arith.constant 0 : i32
    return %arg0, %c0_i32 : i32, i32
  }
}

</mosaic_0001>

<llo_original>
// kernel: tpu_custom_call.1
$region0: #{tpu_custom_call.1}
  #allocation0 [shape = 'u32[]', space=smem, size = 0x4, offset = 0x4, fixed_abs, tag = 'smem constant byte address 0x4 - core index']
  #allocation1 [shape = 'u32[72,128]{1,0:T(1,128)}', space=vmem, size = 0x9000, scoped, tag = 'internal scratch']
  %s0 = inlined_call_operand.vmem [shape: f32[16,32], index: 0, kind: input, shape index: {}]
  %s1 = inlined_call_operand.vmem [shape: f32[32,16], index: 1, kind: input, shape index: {}]
  %s2 = inlined_call_operand.vmem [shape: f32[1,16], index: 2, kind: input, shape index: {}]
  %s3 = inlined_call_operand.vmem [shape: f32[16,8], index: 3, kind: input, shape index: {}]
  %s4 = inlined_call_operand.vmem [shape: f32[16,8], index: 4, kind: output, shape index: {0}]
  %s5 = inlined_call_operand.vmem [shape: s32[16,2], index: 5, kind: output, shape index: {1}]
  %6 = xla_tuple %s4, %s5
  %s7 = sld [smem:[#allocation0]]
  $region57: #{tpu_custom_call.1} parent=0
    _
  %s9 = ssub.s32 1, %s7
  %s10 = scalar_select 0, %s9, %s7
  loop: start=0, step=1, limit=4
  $region2: #{tpu_custom_call.1} parent=0 // loop_pre_header
    _
  $region3: #{tpu_custom_call.1} parent=0 // loop_header
    %s12 = sphi 0, %s16
    %p13 = scmp.ge.s32.totalorder %s12, 4
    %s22 = sphi 0, %s24
    %s25 = sphi 0, %s22
    %s26 = sphi 0, %s25
    %s42 = sphi 0, %s26
    %s46 = sphi 0, %s46
    %s48 = sphi 0, %s46
    %s49 = sphi 0, %s48
    %s63 = sphi 0, %s49
    %s67 = sphi 0, %s67
    %s69 = sphi 0, %s67
    %s70 = sphi 0, %s69
    %s84 = sphi 0, %s70
    %s90 = sphi 0, %s92
    %s93 = sphi 0, %s90
    %s94 = sphi 0, %s93
    %s110 = sphi 0, %s94
    %s116 = sphi 0, %s118
    %s119 = sphi 0, %s116
    %s120 = sphi 0, %s119
    %s136 = sphi 0, %s120
    %s142 = sphi 0, %s144
    %s145 = sphi 0, %s142
    %s146 = sphi 0, %s145
    %s162 = sphi 0, %s146
  $region4: #{tpu_custom_call.1} parent=0 // loop_header_branch
    %15 = sbr.rel (%p13) target = $region8
  $region5: #{tpu_custom_call.1} parent=0 // loop_body
    %s17 = ssub.s32 %s12, 1
    %s18 = ssub.s32 %s12, 2
    %s19 = sadd.s32 %s12, 1
    %s20 = ssub.s32 %s12, %s19
    %p21 = scmp.eq.s32.totalorder %s20, 0
    %s23 = sadd.s32 %s22, 1
    %s24 = scalar_select %p21, %s22, %s23
    %p27 = pneg %p21
    %p28 = scmp.eq.s32.totalorder %s12, 1
    %p29 = por %p27, %p28
    %p30 = scmp.ne.s32.totalorder %s22, %s25
    %p31 = scmp.eq.s32.totalorder %s12, 0
    %p32 = por %p30, %p31
    %p33 = scmp.ne.s32.totalorder %s22, %s25
    %p34 = scmp.eq.s32.totalorder %s17, 1
    %p35 = por %p33, %p34
    %p36 = scmp.ne.s32.totalorder %s25, %s26
    %p37 = scmp.eq.s32.totalorder %s17, 0
    %p38 = por %p36, %p37
    %p39 = scmp.ne.s32.totalorder %s25, %s26
    %p40 = scmp.eq.s32.totalorder %s18, 1
    %p41 = por %p39, %p40
    %p43 = scmp.ne.s32.totalorder %s26, %s42
    %p44 = scmp.eq.s32.totalorder %s18, 0
    %p45 = por %p43, %p44
    %s47 = sadd.s32 %s46, 1
    %p50 = scmp.eq.s32.totalorder %s12, 1
    %p51 = scmp.ne.s32.totalorder %s46, %s48
    %p52 = scmp.eq.s32.totalorder %s12, 0
    %p53 = por %p51, %p52
    %p54 = scmp.ne.s32.totalorder %s46, %s48
    %p55 = scmp.eq.s32.totalorder %s17, 1
    %p56 = por %p54, %p55
    %p57 = scmp.ne.s32.totalorder %s48, %s49
    %p58 = scmp.eq.s32.totalorder %s17, 0
    %p59 = por %p57, %p58
    %p60 = scmp.ne.s32.totalorder %s48, %s49
    %p61 = scmp.eq.s32.totalorder %s18, 1
    %p62 = por %p60, %p61
    %p64 = scmp.ne.s32.totalorder %s49, %s63
    %p65 = scmp.eq.s32.totalorder %s18, 0
    %p66 = por %p64, %p65
    %s68 = sadd.s32 %s67, 1
    %p71 = scmp.eq.s32.totalorder %s12, 1
    %p72 = scmp.ne.s32.totalorder %s67, %s69
    %p73 = scmp.eq.s32.totalorder %s12, 0
    %p74 = por %p72, %p73
    %p75 = scmp.ne.s32.totalorder %s67, %s69
    %p76 = scmp.eq.s32.totalorder %s17, 1
    %p77 = por %p75, %p76
    %p78 = scmp.ne.s32.totalorder %s69, %s70
    %p79 = scmp.eq.s32.totalorder %s17, 0
    %p80 = por %p78, %p79
    %p81 = scmp.ne.s32.totalorder %s69, %s70
    %p82 = scmp.eq.s32.totalorder %s18, 1
    %p83 = por %p81, %p82
    %p85 = scmp.ne.s32.totalorder %s70, %s84
    %p86 = scmp.eq.s32.totalorder %s18, 0
    %p87 = por %p85, %p86
    %s88 = ssub.s32 %s12, %s19
    %p89 = scmp.eq.s32.totalorder %s88, 0
    %s91 = sadd.s32 %s90, 1
    %s92 = scalar_select %p89, %s90, %s91
    %p95 = pneg %p89
    %p96 = scmp.eq.s32.totalorder %s12, 1
    %p97 = por %p95, %p96
    %p98 = scmp.ne.s32.totalorder %s90, %s93
    %p99 = scmp.eq.s32.totalorder %s12, 0
    %p100 = por %p98, %p99
    %p101 = scmp.ne.s32.totalorder %s90, %s93
    %p102 = scmp.eq.s32.totalorder %s17, 1
    %p103 = por %p101, %p102
    %p104 = scmp.ne.s32.totalorder %s93, %s94
    %p105 = scmp.eq.s32.totalorder %s17, 0
    %p106 = por %p104, %p105
    %p107 = scmp.ne.s32.totalorder %s93, %s94
    %p108 = scmp.eq.s32.totalorder %s18, 1
    %p109 = por %p107, %p108
    %p111 = scmp.ne.s32.totalorder %s94, %s110
    %p112 = scmp.eq.s32.totalorder %s18, 0
    %p113 = por %p111, %p112
    %s114 = ssub.s32 %s12, %s19
    %p115 = scmp.eq.s32.totalorder %s114, 0
    %s117 = sadd.s32 %s116, 1
    %s118 = scalar_select %p115, %s116, %s117
    %p121 = pneg %p115
    %p122 = scmp.eq.s32.totalorder %s12, 1
    %p123 = por %p121, %p122
    %p124 = scmp.ne.s32.totalorder %s116, %s119
    %p125 = scmp.eq.s32.totalorder %s12, 0
    %p126 = por %p124, %p125
    %p127 = scmp.ne.s32.totalorder %s116, %s119
    %p128 = scmp.eq.s32.totalorder %s17, 1
    %p129 = por %p127, %p128
    %p130 = scmp.ne.s32.totalorder %s119, %s120
    %p131 = scmp.eq.s32.totalorder %s17, 0
    %p132 = por %p130, %p131
    %p133 = scmp.ne.s32.totalorder %s119, %s120
    %p134 = scmp.eq.s32.totalorder %s18, 1
    %p135 = por %p133, %p134
    %p137 = scmp.ne.s32.totalorder %s120, %s136
    %p138 = scmp.eq.s32.totalorder %s18, 0
    %p139 = por %p137, %p138
    %s140 = ssub.s32 %s12, %s19
    %p141 = scmp.eq.s32.totalorder %s140, 0
    %s143 = sadd.s32 %s142, 1
    %s144 = scalar_select %p141, %s142, %s143
    %p147 = pneg %p141
    %p148 = scmp.eq.s32.totalorder %s12, 1
    %p149 = por %p147, %p148
    %p150 = scmp.ne.s32.totalorder %s142, %s145
    %p151 = scmp.eq.s32.totalorder %s12, 0
    %p152 = por %p150, %p151
    %p153 = scmp.ne.s32.totalorder %s142, %s145
    %p154 = scmp.eq.s32.totalorder %s17, 1
    %p155 = por %p153, %p154
    %p156 = scmp.ne.s32.totalorder %s145, %s146
    %p157 = scmp.eq.s32.totalorder %s17, 0
    %p158 = por %p156, %p157
    %p159 = scmp.ne.s32.totalorder %s145, %s146
    %p160 = scmp.eq.s32.totalorder %s18, 1
    %p161 = por %p159, %p160
    %p163 = scmp.ne.s32.totalorder %s146, %s162
    %p164 = scmp.eq.s32.totalorder %s18, 0
    %p165 = por %p163, %p164
    %p166 = scmp.le.s32.totalorder 1, %s12
    %p167 = scmp.lt.s32.totalorder %s12, 3
    %p168 = pnand %p166, %p167
    %p169 = pneg %p168
    // Predicated region
    $region9: #{tpu_custom_call.1} parent=5 // pred_check
      _
    $region10: #{tpu_custom_call.1} parent=5 // pred_check_branch
      %171 = sbr.rel (%p168) target = $region12
    $region11: #{tpu_custom_call.1} parent=5 // pred_region
      %s172 = ssub.s32 %s12, 1
      // Predicated region
      $region13: #{tpu_custom_call.1} parent=11 // pred_check
        %p173 = pneg %p59
      $region14: #{tpu_custom_call.1} parent=11 // pred_check_branch
        %175 = sbr.rel (%p173) target = $region16
      $region15: #{tpu_custom_call.1} parent=11 // pred_region
        _
      $region16: #{tpu_custom_call.1} parent=11 // pred_fallthru
        _
      // Predicated region
      $region17: #{tpu_custom_call.1} parent=11 // pred_check
        %p176 = pneg %p80
      $region18: #{tpu_custom_call.1} parent=11 // pred_check_branch
        %178 = sbr.rel (%p176) target = $region20
      $region19: #{tpu_custom_call.1} parent=11 // pred_region
        _
      $region20: #{tpu_custom_call.1} parent=11 // pred_fallthru
        _
    $region12: #{tpu_custom_call.1} parent=5 // pred_fallthru
      _
    %p179 = scmp.lt.s32.totalorder %s12, 2
    // Predicated region
    $region21: #{tpu_custom_call.1} parent=5 // pred_check
      %p180 = pneg %p179
    $region22: #{tpu_custom_call.1} parent=5 // pred_check_branch
      %182 = sbr.rel (%p180) target = $region24
    $region23: #{tpu_custom_call.1} parent=5 // pred_region
      // Predicated region
      $region25: #{tpu_custom_call.1} parent=23 // pred_check
        %p183 = pneg %p32
      $region26: #{tpu_custom_call.1} parent=23 // pred_check_branch
        %185 = sbr.rel (%p183) target = $region28
      $region27: #{tpu_custom_call.1} parent=23 // pred_region
        %p186 = scmp.lt.s32.totalorder %s12, 1
        %s187 = scalar_select %p186, %s12, 1
        %s188 = smul.addr %s187, 8
        %s189 = scalar_lea.vmem %s0, %s188
      $region28: #{tpu_custom_call.1} parent=23 // pred_fallthru
        _
      // Predicated region
      $region29: #{tpu_custom_call.1} parent=23 // pred_check
        %p190 = pneg %p100
      $region30: #{tpu_custom_call.1} parent=23 // pred_check_branch
        %192 = sbr.rel (%p190) target = $region32
      $region31: #{tpu_custom_call.1} parent=23 // pred_region
        %p193 = scmp.lt.s32.totalorder %s12, 1
        %s194 = scalar_select %p193, %s12, 1
        %s195 = smul.addr %s194, 8
        %s196 = scalar_lea.vmem %s3, %s195
      $region32: #{tpu_custom_call.1} parent=23 // pred_fallthru
        _
    $region24: #{tpu_custom_call.1} parent=5 // pred_fallthru
      _
    %p197 = scmp.le.s32.totalorder 1, %s12
    %p198 = scmp.lt.s32.totalorder %s12, 3
    %p199 = pnand %p197, %p198
    %p200 = pneg %p199
    // Predicated region
    $region33: #{tpu_custom_call.1} parent=5 // pred_check
      _
    $region34: #{tpu_custom_call.1} parent=5 // pred_check_branch
      %202 = sbr.rel (%p199) target = $region36
    $region35: #{tpu_custom_call.1} parent=5 // pred_region
      %s203 = ssub.s32 %s12, 1
      %p204 = scmp.lt.s32.totalorder %s17, 1
      %s205 = scalar_select %p204, %s17, 1
      %s206 = smul.addr %s205, 8
      %s207 = scalar_lea.vmem %s0, %s206
      %p208 = pneg %p38
      %p209 = pneg %p35
      %p210 = pneg %p59
      %p211 = pneg %p56
      %p212 = pneg %p80
      %p213 = pneg %p77
      %p214 = scmp.lt.s32.totalorder %s17, 1
      %s215 = scalar_select %p214, %s17, 1
      %s216 = smul.addr %s215, 8
      %s217 = scalar_lea.vmem %s3, %s216
      %p218 = pneg %p106
      %p219 = pneg %p103
      %p220 = pneg %p132
      %p221 = pneg %p129
      %p222 = scmp.lt.s32.totalorder %s17, 1
      %s223 = scalar_select %p222, %s17, 1
      %s224 = smul.addr %s223, 8
      %s225 = scalar_lea.vmem %s4, %s224
      %p226 = pneg %p158
      %p227 = pneg %p155
      %p228 = scmp.lt.s32.totalorder %s17, 1
      %s229 = scalar_select %p228, %s17, 1
      %s230 = smul.addr %s229, 8
      %s231 = scalar_lea.vmem %s5, %s230
      %p232 = scmp.lt.s32.totalorder %s17, 1
      %s233 = scalar_select %p232, %s17, 1
      %s234 = smul.addr %s233, 8
      %s235 = scalar_lea.vmem %s0, %s234
      %p236 = scmp.lt.s32.totalorder %s17, 1
      %s237 = scalar_select %p236, %s17, 1
      %s238 = smul.addr %s237, 8
      %s239 = scalar_lea.vmem %s3, %s238
      %p240 = scmp.lt.s32.totalorder %s17, 1
      %s241 = scalar_select %p240, %s17, 1
      %s242 = smul.addr %s241, 8
      %s243 = scalar_lea.vmem %s4, %s242
      %p244 = scmp.lt.s32.totalorder %s17, 1
      %s245 = scalar_select %p244, %s17, 1
      %s246 = smul.addr %s245, 8
      %s247 = scalar_lea.vmem %s5, %s246
      %v248 = vld [vmem:[%s235] sm:$0xff]
      %v249 = vld [vmem:[%s1] sm:$0xff]
      %v250 = vld [vmem:[%s1 + $0x8] sm:$0xff]
      %v251 = vld [vmem:[%s1 + $0x10] sm:$0xff]
      %v252 = vld [vmem:[%s1 + $0x18] sm:$0xff]
      %v253 = vld [vmem:[%s2] sm:$0x1]
      %v255 = vperm.slane %v253, 0
      %vm257 = vcmask 261120
      %v259 = vsel %vm257, %v248, 0
      %261 = vmatpush.msra.mxu0 0.0
      %262 = vmatpush.msra.mxu0 0.0
      %263 = vmatpush.msra.mxu0 0.0
      %264 = vmatpush.msra.mxu0 0.0
      %265 = vmatpush.msra.mxu0 0.0
      %266 = vmatpush.msra.mxu0 0.0
      %267 = vmatpush.msra.mxu0 0.0
      %268 = vmatpush.msra.mxu0 0.0
      %269 = vmatpush.msra.mxu0 0.0
      %270 = vmatpush.msra.mxu0 0.0
      %271 = vmatpush.msra.mxu0 0.0
      %272 = vmatpush.msra.mxu0 0.0
      %273 = vmatpush.msra.mxu0 %v252
      %274 = vmatpush.msra.mxu0 %v251
      %275 = vmatpush.msra.mxu0 %v250
      %276 = vmatpush.msra.mxu0 %v249
      %277 = vmatmul.f32.gmra.mxu0 %v259
      %v278 = vpop.f32.mrf.mxu0
      %v279 = vadd.f32 %v255, %v278
      %280 = vdwg.mxu0
      %v281 = vmax.f32 %v279, 0.0
      %vm282 = vcmp.ne.f32.partialorder %v279, %v279
      %v283 = vadd.f32 %v279, 0.0
      %v284 = vand.u32 2147483647, %v279
      %v285 = vsub.f32 0.0, %v284
      %v286 = vmul.f32 %v285, 1.442695
      %v287 = vpow.pop %v286
      %v288 = vadd.f32 %v287, 1.0
      %v289 = vlog2.pop %v288
      %v290 = vmul.f32 %v289, 0.6931472
      %v291 = vmul.f32 -0.5, %v287
      %v292 = vadd.f32 %v291, 1.0
      %v293 = vmul.f32 %v292, %v287
      %v294 = vand.u32 2147483647, %v287
      %vm295 = vcmp.lt.f32.partialorder %v294, 0.0004427343
      %v296 = vsel %vm295, %v293, %v290
      %v297 = vadd.f32 %v281, %v296
      %v298 = vsel %vm282, %v283, %v297
      %v299 = vld [vmem:[%s239] sm:$0xff]
      %301 = vrot.lane.b32.xlu0 %v298, 120
      %v302 = vpop.permute.xlu0 %301
      %v304 = vmul.f32 %v299, %v302
      %v305 = vadd.f32 %v279, %v304
      %v306 = vlaneseq
      %v307 = vand.u32 %v306, 127
      %vm308 = vcmask 64512
      %v309 = vsel %vm308, %v305, -inf
      %310 = vmax.xlane.f32.xlu0 %v309
      %v311 = vpop.xlane.xlu0 %310
      %vm312 = vcmp.eq.f32.partialorder %v305, %v311
      %v313 = vsel %vm312, %v307, 8
      %v314 = vsel %vm308, %v313, 2147483647
      %v315 = vand.u32 %v314, 65535
      %v316 = vshra.s32 %v314, 16
      %v317 = vcvt.s32.f32 %v315
      %v318 = vcvt.s32.f32 %v316
      %319 = vmin.xlane.f32.xlu0 %v318
      %v320 = vpop.xlane.xlu0 %319
      %vm321 = vcmp.eq.f32.partialorder %v318, %v320
      %v322 = vsel %vm321, %v317, inf
      %323 = vmin.xlane.f32.xlu0 %v322
      %v324 = vpop.xlane.xlu0 %323
      %v325 = vcvt.f32.s32 %v324
      %v326 = vcvt.f32.s32 %v320
      %v327 = vshll.u32 %v326, 16
      %v328 = vadd.s32 %v327, %v325
      %vm329 = vcmp.eq.s32.totalorder %v307, %v328
      %v330 = vsel %vm329, -inf, %v305
      %v331 = vsel %vm308, %v330, -inf
      %332 = vmax.xlane.f32.xlu0 %v331
      %v333 = vpop.xlane.xlu0 %332
      %vm334 = vcmp.eq.f32.partialorder %v330, %v333
      %v335 = vsel %vm334, %v307, 8
      %v336 = vsel %vm308, %v335, 2147483647
      %v337 = vand.u32 %v336, 65535
      %v338 = vshra.s32 %v336, 16
      %v339 = vcvt.s32.f32 %v337
      %v340 = vcvt.s32.f32 %v338
      %341 = vmin.xlane.f32.xlu0 %v340
      %v342 = vpop.xlane.xlu0 %341
      %vm343 = vcmp.eq.f32.partialorder %v340, %v342
      %v344 = vsel %vm343, %v339, inf
      %345 = vmin.xlane.f32.xlu0 %v344
      %v346 = vpop.xlane.xlu0 %345
      %v347 = vcvt.f32.s32 %v346
      %v348 = vcvt.f32.s32 %v342
      %v349 = vshll.u32 %v348, 16
      %v350 = vadd.s32 %v349, %v347
      %vm351 = vcmp.eq.s32.totalorder %v307, %v350
      %v352 = vsel %vm351, -inf, %v330
      %vm353 = vcmp.eq.f32.partialorder %v352, -inf
      %v354 = vsub.f32 %v305, %v311
      %v355 = vmul.f32 %v354, 1.442695
      %v356 = vpow.pop %v355
      %v357 = vsel %vm353, %v356, 0.0
      %v358 = vsel %vm308, %v357, 0.0
      %359 = vadd.xlane.f32.xlu0 %v358
      %v360 = vpop.xlane.xlu0 %359
      %v361 = vrcp.pop %v360
      %v362 = vmul.f32 %v357, %v361
      %363 = vst.msk [vmem:[%s243] sm:$0xff] %vm308, %v362
      %vm364 = vcmask 7168
      %v365 = vsel %vm364, %v328, %v350
      %vm366 = vcmask 15360
      %367 = vst.msk [vmem:[%s247] sm:$0xff] %vm366, %v365
      %p368 = scmp.lt.s32.totalorder %s17, 1
      %s369 = scalar_select %p368, %s17, 1
      %s370 = smul.addr %s369, 8
      %s371 = scalar_lea.vmem %s4, %s370
      %p372 = scmp.lt.s32.totalorder %s17, 1
      %s373 = scalar_select %p372, %s17, 1
      %s374 = smul.addr %s373, 8
      %s375 = scalar_lea.vmem %s5, %s374
      // Predicated region
      $region37: #{tpu_custom_call.1} parent=35 // pred_check
        %p376 = pneg %p129
      $region38: #{tpu_custom_call.1} parent=35 // pred_check_branch
        %378 = sbr.rel (%p376) target = $region40
      $region39: #{tpu_custom_call.1} parent=35 // pred_region
        _
      $region40: #{tpu_custom_call.1} parent=35 // pred_fallthru
        _
      // Predicated region
      $region41: #{tpu_custom_call.1} parent=35 // pred_check
        %p379 = pneg %p155
      $region42: #{tpu_custom_call.1} parent=35 // pred_check_branch
        %381 = sbr.rel (%p379) target = $region44
      $region43: #{tpu_custom_call.1} parent=35 // pred_region
        _
      $region44: #{tpu_custom_call.1} parent=35 // pred_fallthru
        _
    $region36: #{tpu_custom_call.1} parent=5 // pred_fallthru
      _
    %p382 = scmp.le.s32.totalorder 2, %s12
    // Predicated region
    $region45: #{tpu_custom_call.1} parent=5 // pred_check
      %p383 = pneg %p382
    $region46: #{tpu_custom_call.1} parent=5 // pred_check_branch
      %385 = sbr.rel (%p383) target = $region48
    $region47: #{tpu_custom_call.1} parent=5 // pred_region
      %s386 = ssub.s32 %s12, 2
      // Predicated region
      $region49: #{tpu_custom_call.1} parent=47 // pred_check
        %p387 = pneg %p135
      $region50: #{tpu_custom_call.1} parent=47 // pred_check_branch
        %389 = sbr.rel (%p387) target = $region52
      $region51: #{tpu_custom_call.1} parent=47 // pred_region
        %p390 = scmp.lt.s32.totalorder %s18, 1
        %s391 = scalar_select %p390, %s18, 1
        %s392 = smul.addr %s391, 8
        %s393 = scalar_lea.vmem %s4, %s392
      $region52: #{tpu_custom_call.1} parent=47 // pred_fallthru
        _
      // Predicated region
      $region53: #{tpu_custom_call.1} parent=47 // pred_check
        %p394 = pneg %p161
      $region54: #{tpu_custom_call.1} parent=47 // pred_check_branch
        %396 = sbr.rel (%p394) target = $region56
      $region55: #{tpu_custom_call.1} parent=47 // pred_region
        %p397 = scmp.lt.s32.totalorder %s18, 1
        %s398 = scalar_select %p397, %s18, 1
        %s399 = smul.addr %s398, 8
        %s400 = scalar_lea.vmem %s5, %s399
      $region56: #{tpu_custom_call.1} parent=47 // pred_fallthru
        _
    $region48: #{tpu_custom_call.1} parent=5 // pred_fallthru
      _
  $region6: #{tpu_custom_call.1} parent=0 // loop_footer
    %s16 = sadd.s32 1, %s12
  $region7: #{tpu_custom_call.1} parent=0 // loop_footer_branch
    %11 = sbr.rel target = $region3
  $region8: #{tpu_custom_call.1} parent=0 // loop_exit
    _

</llo_original>
